<compile_context>
chip_gen: v6e
topology: v6e:2x2x1
jax: 0.10.0
libtpu: 0.0.40
codegen_flags: <defaults>
</compile_context>

<pallas_src>
import functools

import jax
import jax.numpy as jnp
from jax.experimental import pallas as pl
from jax.experimental.pallas import tpu as pltpu


def _round_up(x, m):
    return ((x + m - 1) // m) * m


# ---------------------------------------------------------------------------
# In-kernel helpers (pure jnp; traced inside the Pallas kernel body)
# ---------------------------------------------------------------------------
def _l2norm(x, eps=1e-12):
    # torch.nn.functional.normalize(p=2, dim=-1, eps=1e-12)
    n = jnp.sqrt(jnp.sum(x * x, axis=-1, keepdims=True))
    return x / jnp.maximum(n, eps)


def _lstm_zero_step_q(b4h):
    # One LSTM step with zero input and zero (h, c). b4h = (b_ih + b_hh) as (4, H),
    # PyTorch gate order: i, f, g, o.
    i = jax.nn.sigmoid(b4h[0:1, :])
    g = jnp.tanh(b4h[2:3, :])
    o = jax.nn.sigmoid(b4h[3:4, :])
    c = i * g
    return o * jnp.tanh(c)  # (1, H)


def _set2set_1step_qr(x_emb, b4h, valid_mask):
    # torch_geometric Set2Set(processing_steps=1) called without a batch vector:
    # all (valid) rows of x_emb form a single set. Padded rows are masked out of
    # the softmax.  Pure VPU/XLU math (broadcast multiply + lane/sublane reduce).
    q = _lstm_zero_step_q(b4h)                             # (1, H)
    e = jnp.sum(q * x_emb, axis=-1, keepdims=True)         # (G, 1)  lane reduce
    e = jnp.where(valid_mask, e, -1e30)                    # mask padded graph rows
    e = e - jnp.max(e, axis=0, keepdims=True)
    p = jnp.exp(e)
    a = p / jnp.sum(p, axis=0, keepdims=True)              # softmax over the set
    r = jnp.sum(a * x_emb, axis=0, keepdims=True)          # (1, H)  sublane reduce
    return q, r


# ---------------------------------------------------------------------------
# Pallas kernel: node-axis grid with pooled accumulator; epilogue on last step
# ---------------------------------------------------------------------------
def mixgate_kernel(x_ref, batch_ref, rc_ref, w_ref, b0_ref, bt_ref, te_ref,
                   o_ref, pooled_acc,
                   *, gt, ga, g_t_pad, g_a_pad, alpha, temp, eps=1e-12):
    k = pl.program_id(0)
    g_pad = g_t_pad + g_a_pad
    node_tile = x_ref.shape[0]

    @pl.when(k == 0)
    def _init():
        pooled_acc[...] = jnp.zeros_like(pooled_acc)

    # --- build exact 0/1 one-hot pooling tile in-kernel (VPU compare) ---------
    # batch_ref: (1, node_tile) int32, -1 for padded nodes (never matches).
    g_iota = jax.lax.broadcasted_iota(jnp.int32, (g_pad, node_tile), 0)
    onehot = (g_iota == batch_ref[...]).astype(x_ref.dtype)        # (G_pad, tile_N)

    # --- pooling: standard (M,K)x(K,N) MXU matmul, f32 accumulation -----------
    pooled_acc[...] += jnp.dot(onehot, x_ref[...],
                               preferred_element_type=jnp.float32)  # (G_pad, D_in)

    @pl.when(k == pl.num_programs(0) - 1)
    def _finalize():
        # mean pooling: exact 0/1 sums divided by f32 reciprocal counts
        pooled = pooled_acc[...] * rc_ref[...]                      # (G_pad, D_in)

        # shared Linear projection + per-graph L2 normalize
        emb = jnp.dot(pooled.astype(w_ref.dtype), w_ref[...],
                      preferred_element_type=jnp.float32)           # (G_pad, H)
        emb = _l2norm(emb, eps)

        # target / aux slices start on sublane boundaries (g_t_pad % 8 == 0)
        t_emb = emb[:g_t_pad, :]
        a_emb = emb[g_t_pad:g_t_pad + g_a_pad, :]
        t_mask = jax.lax.broadcasted_iota(jnp.int32, (g_t_pad, 1), 0) < gt
        a_mask = jax.lax.broadcasted_iota(jnp.int32, (g_a_pad, 1), 0) < ga

        # Set2Set (1 step, single set), kept as (q, r) pairs
        q_t, r_t = _set2set_1step_qr(t_emb, b0_ref[...].astype(jnp.float32), t_mask)
        q_a, r_a = _set2set_1step_qr(a_emb, bt_ref[...].astype(jnp.float32), a_mask)

        # structure_affinity = <normalize([q_t, r_t]), normalize([q_a, r_a])>
        def _cat_norm(q, r):
            return jnp.maximum(
                jnp.sqrt(jnp.sum(q * q, axis=-1, keepdims=True) +
                         jnp.sum(r * r, axis=-1, keepdims=True)), eps)

        dot_qr = (jnp.sum(q_t * q_a, axis=-1, keepdims=True) +
                  jnp.sum(r_t * r_a, axis=-1, keepdims=True))
        structure_affinity = dot_qr / (_cat_norm(q_t, r_t) * _cat_norm(q_a, r_a))

        # task affinity (f32 throughout)
        te = te_ref[...].astype(jnp.float32)                        # (2, H)
        te0, tet = te[0:1, :], te[1:2, :]
        n0 = jnp.maximum(jnp.sqrt(jnp.sum(te0 * te0, -1, keepdims=True)), eps)
        n1 = jnp.maximum(jnp.sqrt(jnp.sum(tet * tet, -1, keepdims=True)), eps)
        task_affinity = jnp.sum(te0 * tet, -1, keepdims=True) / (n0 * n1)

        gate = jax.nn.sigmoid(((1.0 - alpha) * task_affinity
                               + alpha * structure_affinity) / temp)

        # Lane-dense (1, 128) output: lanes 0..2 = gate, sig(task), sig(struct).
        lane = jax.lax.broadcasted_iota(jnp.int32, (1, 128), 1)
        row = jnp.where(lane == 0, gate,
              jnp.where(lane == 1, jax.nn.sigmoid(task_affinity),
              jnp.where(lane == 2, jax.nn.sigmoid(structure_affinity),
                        jnp.zeros_like(gate))))
        o_ref[...] = row


# ---------------------------------------------------------------------------
# Plain-JAX glue
# ---------------------------------------------------------------------------
def mix_gate_forward(params, target_x, aux_x, target_batch, aux_batch,
                     num_target_graphs, num_aux_graphs, task_id,
                     alpha=0.1, temp=0.1, matmul_dtype=jnp.bfloat16,
                     node_tile_max=2048):
    gt, ga = int(num_target_graphs), int(num_aux_graphs)
    nt, na = target_x.shape[0], aux_x.shape[0]
    d_in = target_x.shape[1]
    hidden = params["task_embedding"].shape[1]

    g_t_pad = _round_up(max(gt, 1), 8)
    g_a_pad = _round_up(max(ga, 1), 8)
    g_pad = g_t_pad + g_a_pad

    n_total = nt + na
    node_tile = min(node_tile_max, _round_up(max(n_total, 1), 128))
    n_pad = _round_up(n_total, node_tile)
    n_tiles = n_pad // node_tile

    # X stays in native (N, D_in) layout: single concat + bf16 cast + pad pass.
    x_all = jnp.concatenate([target_x, aux_x], axis=0).astype(matmul_dtype)
    if n_pad > n_total:
        x_all = jnp.pad(x_all, ((0, n_pad - n_total), (0, 0)))

    # Concatenated batch ids (aux ids offset by g_t_pad); -1 marks padded nodes.
    batch_all = jnp.full((n_pad,), -1, jnp.int32)
    batch_all = batch_all.at[:nt].set(target_batch.astype(jnp.int32))
    batch_all = batch_all.at[nt:n_total].set(aux_batch.astype(jnp.int32) + g_t_pad)
    batch_all = batch_all.reshape(1, n_pad)

    # Per-graph reciprocal node counts (0 for padded graph rows), f32.
    counts = jnp.zeros((g_pad,), jnp.float32)
    counts = counts.at[target_batch].add(1.0)
    counts = counts.at[aux_batch + g_t_pad].add(1.0)
    recip_counts = jnp.where(counts > 0, 1.0 / jnp.maximum(counts, 1.0), 0.0)
    recip_counts = recip_counts.reshape(g_pad, 1)

    w_t = params["linear_w"].T.astype(matmul_dtype)                   # (D_in, H)
    b0 = (params["lstm_b_ih"][0] + params["lstm_b_hh"][0]).reshape(4, hidden)
    bt = (params["lstm_b_ih"][task_id] + params["lstm_b_hh"][task_id]).reshape(4, hidden)
    te = jnp.stack([params["task_embedding"][0],
                    params["task_embedding"][task_id]], axis=0)       # (2, H)

    operands = (x_all, batch_all, recip_counts, w_t, b0, bt, te)

    # Cost estimate reflects the pool-matrix-free HBM traffic.
    in_bytes = sum(int(a.size) * a.dtype.itemsize for a in operands)
    out_bytes = 128 * 4
    flops = (2 * g_pad * n_pad * d_in                # pooling matmul
             + 2 * g_pad * d_in * hidden             # projection matmul
             + 32 * g_pad * hidden)                  # normalize / attention misc
    cost = pl.CostEstimate(flops=flops, transcendentals=16 * hidden + 64,
                           bytes_accessed=in_bytes + out_bytes)

    # VMEM budget: double-buffered node tiles + resident params/scratch + headroom.
    tile_bytes = node_tile * d_in * x_all.dtype.itemsize + node_tile * 4
    small_bytes = (int(recip_counts.size) * 4 + int(w_t.size) * w_t.dtype.itemsize
                   + int(b0.size) * 4 + int(bt.size) * 4 + int(te.size) * 4
                   + g_pad * d_in * 4 + out_bytes)
    vmem_limit = int(min(32 * 1024 * 1024,
                         max(4 * 1024 * 1024,
                             4 * tile_bytes + 4 * small_bytes + (1 << 20))))

    kernel = functools.partial(mixgate_kernel, gt=gt, ga=ga,
                               g_t_pad=g_t_pad, g_a_pad=g_a_pad,
                               alpha=float(alpha), temp=float(temp))

    out = pl.pallas_call(
        kernel,
        out_shape=jax.ShapeDtypeStruct((1, 128), jnp.float32),
        grid_spec=pltpu.PrefetchScalarGridSpec(
            num_scalar_prefetch=0,
            grid=(n_tiles,),
            in_specs=[
                pl.BlockSpec((node_tile, d_in), lambda k: (k, 0)),   # X tile
                pl.BlockSpec((1, node_tile), lambda k: (0, k)),      # batch ids tile
                pl.BlockSpec((g_pad, 1), lambda k: (0, 0)),          # 1/counts
                pl.BlockSpec((d_in, hidden), lambda k: (0, 0)),      # W^T
                pl.BlockSpec((4, hidden), lambda k: (0, 0)),         # lstm bias (target)
                pl.BlockSpec((4, hidden), lambda k: (0, 0)),         # lstm bias (aux)
                pl.BlockSpec((2, hidden), lambda k: (0, 0)),         # task embeddings
            ],
            out_specs=pl.BlockSpec((1, 128), lambda k: (0, 0)),
            scratch_shapes=[pltpu.VMEM((g_pad, d_in), jnp.float32)],
        ),
        compiler_params=pltpu.CompilerParams(
            dimension_semantics=("arbitrary",),
            vmem_limit_bytes=vmem_limit),
        cost_estimate=cost,
    )(*operands)

    gate = out[0, 0:1]            # matches torch shape (1,)
    sig_task = out[0, 1]          # matches torch 0-dim scalar
    sig_struct = out[0, 2:3]      # matches torch shape (1,)
    return gate, sig_task, sig_struct


# ---------------------------------------------------------------------------
# Pure-JAX reference (f32) for a sanity check
# ---------------------------------------------------------------------------
def mix_gate_reference(params, target_x, aux_x, target_batch, aux_batch,
                       num_target_graphs, num_aux_graphs, task_id,
                       alpha=0.1, temp=0.1):
    def l2(x):
        return x / jnp.maximum(jnp.sqrt(jnp.sum(x * x, -1, keepdims=True)), 1e-12)

    w = params["linear_w"]                                              # (H, D_in)

    def branch(x, batch, g, bias_idx):
        feats = x @ w.T                                                 # (N, H)
        onehot = jax.nn.one_hot(batch, g, dtype=jnp.float32)            # (N, G)
        pooled = (onehot.T @ feats) / jnp.maximum(onehot.sum(0)[:, None], 1.0)
        emb = l2(pooled)                                                # (G, H)
        b4 = (params["lstm_b_ih"][bias_idx] + params["lstm_b_hh"][bias_idx]).reshape(4, -1)
        i = jax.nn.sigmoid(b4[0]); gg = jnp.tanh(b4[2]); o = jax.nn.sigmoid(b4[3])
        q = (o * jnp.tanh(i * gg))[None, :]                             # (1, H)
        e = emb @ q.T                                                   # (G, 1)
        a = jax.nn.softmax(e, axis=0)
        r = jnp.sum(a * emb, axis=0, keepdims=True)                     # (1, H)
        return l2(jnp.concatenate([q, r], axis=-1))                     # (1, 2H)

    ts = branch(target_x, target_batch, num_target_graphs, 0)
    asb = branch(aux_x, aux_batch, num_aux_graphs, task_id)
    saff = jnp.sum(ts * asb)
    te = l2(params["task_embedding"])
    taff = jnp.sum(te[0] * te[task_id])
    gate = jax.nn.sigmoid(((1 - alpha) * taff + alpha * saff) / temp)
    return gate, jax.nn.sigmoid(taff), jax.nn.sigmoid(saff)


# ---------------------------------------------------------------------------
# Deterministic parameter init (shapes from MixGate.__init__)
# ---------------------------------------------------------------------------
def init_params(key, n_tasks, input_size, hidden_size):
    k1, k2, k3, k4 = jax.random.split(key, 4)

    # task_embedding: orthogonal rows, then rows 1: copied from row 1
    a = jax.random.normal(k1, (hidden_size, n_tasks), dtype=jnp.float32)
    q, _ = jnp.linalg.qr(a)
    te = q.T[:n_tasks]
    if n_tasks > 1:
        te = te.at[1:].set(te[1])

    # structure_embeddings: Linear(input_size, hidden_size, bias=False)
    bound = 1.0 / (input_size ** 0.5)
    linear_w = jax.random.uniform(k2, (hidden_size, input_size),
                                  minval=-bound, maxval=bound, dtype=jnp.float32)

    # Set2Set LSTM(2H -> H) biases per task
    # TODO(synk): LSTM weight matrices are unused for 1 processing step from zero
    # input/state (only b_ih + b_hh matter), so they are intentionally not materialized.
    hb = 1.0 / (hidden_size ** 0.5)
    lstm_b_ih = jax.random.uniform(k3, (n_tasks, 4 * hidden_size),
                                   minval=-hb, maxval=hb, dtype=jnp.float32)
    lstm_b_hh = jax.random.uniform(k4, (n_tasks, 4 * hidden_size),
                                   minval=-hb, maxval=hb, dtype=jnp.float32)

    # TODO(synk): ini_structure_embeddings / ini_structure_pool are never used in
    # forward(); intentionally not materialized here.
    return dict(task_embedding=te, linear_w=linear_w,
                lstm_b_ih=lstm_b_ih, lstm_b_hh=lstm_b_hh)


if __name__ == "__main__":
    n_tasks, input_size, hidden_size = 3, 16, 32
    key = jax.random.PRNGKey(0)
    kp, kx1, kx2 = jax.random.split(key, 3)

    params = init_params(kp, n_tasks, input_size, hidden_size)

    num_target_graphs, num_aux_graphs = 3, 4
    n_target_nodes, n_aux_nodes = 24, 32
    target_x = jax.random.normal(kx1, (n_target_nodes, input_size), dtype=jnp.float32)
    aux_x = jax.random.normal(kx2, (n_aux_nodes, input_size), dtype=jnp.float32)
    target_batch = jnp.repeat(jnp.arange(num_target_graphs), n_target_nodes // num_target_graphs)
    aux_batch = jnp.repeat(jnp.arange(num_aux_graphs), n_aux_nodes // num_aux_graphs)
    task_id = 2

    gate, sig_task, sig_struct = mix_gate_forward(
        params, target_x, aux_x, target_batch, aux_batch,
        num_target_graphs, num_aux_graphs, task_id, alpha=0.1, temp=0.1)
    jax.block_until_ready((gate, sig_task, sig_struct))

    # Sanity check against the pure-JAX f32 reference (bf16 matmuls -> loose tol).
    g_ref, t_ref, s_ref = mix_gate_reference(
        params, target_x, aux_x, target_batch, aux_batch,
        num_target_graphs, num_aux_graphs, task_id, alpha=0.1, temp=0.1)
    err = max(float(jnp.abs(gate[0] - g_ref)),
              float(jnp.abs(sig_task - t_ref)),
              float(jnp.abs(sig_struct[0] - s_ref)))
    assert err < 5e-2, f"kernel/reference mismatch: max abs err = {err}"

    print("KERNEL_OK")
</pallas_src>

<mosaic_0001>
module attributes {stable_mosaic.version = 11 : i64} {
  func.func @mixgate_kernel(%arg0: i32, %arg1: memref<128x16xbf16, #tpu.memory_space<vmem>>, %arg2: memref<1x128xi32, #tpu.memory_space<vmem>>, %arg3: memref<16x1xf32, #tpu.memory_space<vmem>>, %arg4: memref<16x32xbf16, #tpu.memory_space<vmem>>, %arg5: memref<4x32xf32, #tpu.memory_space<vmem>>, %arg6: memref<4x32xf32, #tpu.memory_space<vmem>>, %arg7: memref<2x32xf32, #tpu.memory_space<vmem>>, %arg8: memref<1x128xf32, #tpu.memory_space<vmem>>, %arg9: memref<16x16xf32, #tpu.memory_space<vmem>>) attributes {dimension_semantics = [#tpu.dimension_semantics<arbitrary>], iteration_bounds = array<i64: 1>, scalar_prefetch = 0 : i64, scratch_operands = 1 : i64, tpu.core_type = #tpu.core_type<tc>, window_params = [{transform_indices = @transform_0, window_bounds = array<i64: 128, 16>}, {transform_indices = @transform_1, window_bounds = array<i64: 1, 128>}, {pipeline_mode = #tpu.pipeline_mode<synchronous>, transform_indices = @transform_2, window_bounds = array<i64: 16, 1>}, {pipeline_mode = #tpu.pipeline_mode<synchronous>, transform_indices = @transform_3, window_bounds = array<i64: 16, 32>}, {pipeline_mode = #tpu.pipeline_mode<synchronous>, transform_indices = @transform_4, window_bounds = array<i64: 4, 32>}, {pipeline_mode = #tpu.pipeline_mode<synchronous>, transform_indices = @transform_5, window_bounds = array<i64: 4, 32>}, {pipeline_mode = #tpu.pipeline_mode<synchronous>, transform_indices = @transform_6, window_bounds = array<i64: 2, 32>}, {pipeline_mode = #tpu.pipeline_mode<synchronous>, transform_indices = @transform_7, window_bounds = array<i64: 1, 128>}]} {
    %c0_i32 = arith.constant 0 : i32
    %0 = arith.cmpi eq, %arg0, %c0_i32 : i32
    %1 = arith.extui %0 : i1 to i32
    %c0_i32_0 = arith.constant 0 : i32
    %2 = arith.cmpi ne, %1, %c0_i32_0 : i32
    scf.if %2 {
      %cst_10 = arith.constant 0.000000e+00 : f32
      %18 = vector.broadcast %cst_10 : f32 to vector<16x16xf32>
      %c0_11 = arith.constant 0 : index
      %c0_12 = arith.constant 0 : index
      %19 = vector.load %arg9[%c0_11, %c0_12] : memref<16x16xf32, #tpu.memory_space<vmem>>, vector<16x16xf32>
      tpu.vector_store %arg9[%c0_11, %c0_12], %18 {strides = array<i32>} : memref<16x16xf32, #tpu.memory_space<vmem>>, vector<16x16xf32>,
    } else {
    }
    %3 = tpu.iota {dimensions = array<i32: 0>} : vector<16x128xi32>
    %c0 = arith.constant 0 : index
    %c0_1 = arith.constant 0 : index
    %4 = vector.load %arg2[%c0, %c0_1] : memref<1x128xi32, #tpu.memory_space<vmem>>, vector<1x128xi32>
    %5 = vector.broadcast %4 : vector<1x128xi32> to vector<16x128xi32>
    %6 = arith.cmpi eq, %3, %5 : vector<16x128xi32>
    %7 = arith.extui %6 : vector<16x128xi1> to vector<16x128xi32>
    %8 = arith.sitofp %7 : vector<16x128xi32> to vector<16x128xf32>
    %9 = arith.truncf %8 : vector<16x128xf32> to vector<16x128xbf16>
    %c0_2 = arith.constant 0 : index
    %c0_3 = arith.constant 0 : index
    %10 = vector.load %arg9[%c0_2, %c0_3] : memref<16x16xf32, #tpu.memory_space<vmem>>, vector<16x16xf32>
    %c0_4 = arith.constant 0 : index
    %c0_5 = arith.constant 0 : index
    %11 = vector.load %arg1[%c0_4, %c0_5] : memref<128x16xbf16, #tpu.memory_space<vmem>>, vector<128x16xbf16>
    %cst = arith.constant dense<0.000000e+00> : vector<16x16xf32>
    %12 = tpu.matmul %9, %11, %cst {dimension_numbers = #tpu.dot_dimension_numbers<[1], [0], [0], [1], [0, 0, 1, 1], [], []>} : vector<16x128xbf16>, vector<128x16xbf16>, vector<16x16xf32> -> vector<16x16xf32>
    %13 = arith.addf %10, %12 : vector<16x16xf32>
    %c0_6 = arith.constant 0 : index
    %c0_7 = arith.constant 0 : index
    %14 = vector.load %arg9[%c0_6, %c0_7] : memref<16x16xf32, #tpu.memory_space<vmem>>, vector<16x16xf32>
    tpu.vector_store %arg9[%c0_6, %c0_7], %13 {strides = array<i32>} : memref<16x16xf32, #tpu.memory_space<vmem>>, vector<16x16xf32>,
    %c0_i32_8 = arith.constant 0 : i32
    %15 = arith.cmpi eq, %arg0, %c0_i32_8 : i32
    %16 = arith.extui %15 : i1 to i32
    %c0_i32_9 = arith.constant 0 : i32
    %17 = arith.cmpi ne, %16, %c0_i32_9 : i32
    scf.if %17 {
      %c0_10 = arith.constant 0 : index
      %c0_11 = arith.constant 0 : index
      %18 = vector.load %arg9[%c0_10, %c0_11] : memref<16x16xf32, #tpu.memory_space<vmem>>, vector<16x16xf32>
      %c0_12 = arith.constant 0 : index
      %c0_13 = arith.constant 0 : index
      %19 = vector.load %arg3[%c0_12, %c0_13] : memref<16x1xf32, #tpu.memory_space<vmem>>, vector<16x1xf32>
      %20 = vector.broadcast %19 : vector<16x1xf32> to vector<16x16xf32>
      %21 = arith.mulf %18, %20 : vector<16x16xf32>
      %22 = arith.truncf %21 : vector<16x16xf32> to vector<16x16xbf16>
      %c0_14 = arith.constant 0 : index
      %c0_15 = arith.constant 0 : index
      %23 = vector.load %arg4[%c0_14, %c0_15] : memref<16x32xbf16, #tpu.memory_space<vmem>>, vector<16x32xbf16>
      %cst_16 = arith.constant dense<0.000000e+00> : vector<16x32xf32>
      %24 = tpu.matmul %22, %23, %cst_16 {dimension_numbers = #tpu.dot_dimension_numbers<[1], [0], [0], [1], [0, 0, 1, 1], [], []>} : vector<16x16xbf16>, vector<16x32xbf16>, vector<16x32xf32> -> vector<16x32xf32>
      %25 = arith.mulf %24, %24 : vector<16x32xf32>
      %cst_17 = arith.constant dense<0.000000e+00> : vector<16xf32>
      %26 = vector.multi_reduction <add>, %25, %cst_17 [1] : vector<16x32xf32> to vector<16xf32>
      %27 = vector.shape_cast %26 : vector<16xf32> to vector<16x1xf32>
      %28 = math.sqrt %27 : vector<16x1xf32>
      %cst_18 = arith.constant 9.99999996E-13 : f32
      %29 = vector.broadcast %cst_18 : f32 to vector<16x1xf32>
      %30 = arith.maximumf %28, %29 : vector<16x1xf32>
      %31 = vector.broadcast %30 : vector<16x1xf32> to vector<16x32xf32>
      %32 = arith.divf %24, %31 : vector<16x32xf32>
      %33 = vector.extract_strided_slice %32 {offsets = [0, 0], sizes = [8, 32], strides = [1, 1]} : vector<16x32xf32> to vector<8x32xf32>
      %34 = vector.extract_strided_slice %32 {offsets = [8, 0], sizes = [8, 32], strides = [1, 1]} : vector<16x32xf32> to vector<8x32xf32>
      %35 = tpu.iota {dimensions = array<i32: 0>} : vector<8x1xi32>
      %c3_i32 = arith.constant 3 : i32
      %36 = vector.broadcast %c3_i32 : i32 to vector<8x1xi32>
      %37 = arith.cmpi slt, %35, %36 : vector<8x1xi32>
      %38 = tpu.iota {dimensions = array<i32: 0>} : vector<8x1xi32>
      %c4_i32 = arith.constant 4 : i32
      %39 = vector.broadcast %c4_i32 : i32 to vector<8x1xi32>
      %40 = arith.cmpi slt, %38, %39 : vector<8x1xi32>
      %c0_19 = arith.constant 0 : index
      %c0_20 = arith.constant 0 : index
      %41 = vector.load %arg5[%c0_19, %c0_20] : memref<4x32xf32, #tpu.memory_space<vmem>>, vector<4x32xf32>
      %42 = vector.extract_strided_slice %41 {offsets = [0, 0], sizes = [1, 32], strides = [1, 1]} : vector<4x32xf32> to vector<1x32xf32>
      %43 = arith.negf %42 : vector<1x32xf32>
      %44 = math.exp %43 : vector<1x32xf32>
      %cst_21 = arith.constant 1.000000e+00 : f32
      %45 = vector.broadcast %cst_21 : f32 to vector<1x32xf32>
      %46 = arith.addf %45, %44 : vector<1x32xf32>
      %47 = arith.divf %45, %46 : vector<1x32xf32>
      %48 = vector.extract_strided_slice %41 {offsets = [2, 0], sizes = [1, 32], strides = [1, 1]} : vector<4x32xf32> to vector<1x32xf32>
      %49 = math.tanh %48 : vector<1x32xf32>
      %50 = vector.extract_strided_slice %41 {offsets = [3, 0], sizes = [1, 32], strides = [1, 1]} : vector<4x32xf32> to vector<1x32xf32>
      %51 = arith.negf %50 : vector<1x32xf32>
      %52 = math.exp %51 : vector<1x32xf32>
      %cst_22 = arith.constant 1.000000e+00 : f32
      %53 = vector.broadcast %cst_22 : f32 to vector<1x32xf32>
      %54 = arith.addf %53, %52 : vector<1x32xf32>
      %55 = arith.divf %53, %54 : vector<1x32xf32>
      %56 = arith.mulf %47, %49 : vector<1x32xf32>
      %57 = math.tanh %56 : vector<1x32xf32>
      %58 = arith.mulf %55, %57 : vector<1x32xf32>
      %59 = vector.broadcast %58 : vector<1x32xf32> to vector<8x32xf32>
      %60 = arith.mulf %59, %33 : vector<8x32xf32>
      %cst_23 = arith.constant dense<0.000000e+00> : vector<8xf32>
      %61 = vector.multi_reduction <add>, %60, %cst_23 [1] : vector<8x32xf32> to vector<8xf32>
      %62 = vector.shape_cast %61 : vector<8xf32> to vector<8x1xf32>
      %cst_24 = arith.constant -1.000000e+30 : f32
      %63 = vector.broadcast %cst_24 : f32 to vector<8x1xf32>
      %64 = arith.select %37, %62, %63 : vector<8x1xi1>, vector<8x1xf32>
      %cst_25 = arith.constant dense<0xFF800000> : vector<1xf32>
      %65 = vector.multi_reduction <maximumf>, %64, %cst_25 [0] : vector<8x1xf32> to vector<1xf32>
      %66 = vector.shape_cast %65 : vector<1xf32> to vector<1x1xf32>
      %67 = vector.broadcast %66 : vector<1x1xf32> to vector<8x1xf32>
      %68 = arith.subf %64, %67 : vector<8x1xf32>
      %69 = math.exp %68 : vector<8x1xf32>
      %cst_26 = arith.constant dense<0.000000e+00> : vector<1xf32>
      %70 = vector.multi_reduction <add>, %69, %cst_26 [0] : vector<8x1xf32> to vector<1xf32>
      %71 = vector.shape_cast %70 : vector<1xf32> to vector<1x1xf32>
      %72 = vector.broadcast %71 : vector<1x1xf32> to vector<8x1xf32>
      %73 = arith.divf %69, %72 : vector<8x1xf32>
      %74 = vector.broadcast %73 : vector<8x1xf32> to vector<8x32xf32>
      %75 = arith.mulf %74, %33 : vector<8x32xf32>
      %cst_27 = arith.constant dense<0.000000e+00> : vector<32xf32>
      %76 = vector.multi_reduction <add>, %75, %cst_27 [0] : vector<8x32xf32> to vector<32xf32>
      %77 = vector.shape_cast %76 : vector<32xf32> to vector<1x32xf32>
      %c0_28 = arith.constant 0 : index
      %c0_29 = arith.constant 0 : index
      %78 = vector.load %arg6[%c0_28, %c0_29] : memref<4x32xf32, #tpu.memory_space<vmem>>, vector<4x32xf32>
      %79 = vector.extract_strided_slice %78 {offsets = [0, 0], sizes = [1, 32], strides = [1, 1]} : vector<4x32xf32> to vector<1x32xf32>
      %80 = arith.negf %79 : vector<1x32xf32>
      %81 = math.exp %80 : vector<1x32xf32>
      %cst_30 = arith.constant 1.000000e+00 : f32
      %82 = vector.broadcast %cst_30 : f32 to vector<1x32xf32>
      %83 = arith.addf %82, %81 : vector<1x32xf32>
      %84 = arith.divf %82, %83 : vector<1x32xf32>
      %85 = vector.extract_strided_slice %78 {offsets = [2, 0], sizes = [1, 32], strides = [1, 1]} : vector<4x32xf32> to vector<1x32xf32>
      %86 = math.tanh %85 : vector<1x32xf32>
      %87 = vector.extract_strided_slice %78 {offsets = [3, 0], sizes = [1, 32], strides = [1, 1]} : vector<4x32xf32> to vector<1x32xf32>
      %88 = arith.negf %87 : vector<1x32xf32>
      %89 = math.exp %88 : vector<1x32xf32>
      %cst_31 = arith.constant 1.000000e+00 : f32
      %90 = vector.broadcast %cst_31 : f32 to vector<1x32xf32>
      %91 = arith.addf %90, %89 : vector<1x32xf32>
      %92 = arith.divf %90, %91 : vector<1x32xf32>
      %93 = arith.mulf %84, %86 : vector<1x32xf32>
      %94 = math.tanh %93 : vector<1x32xf32>
      %95 = arith.mulf %92, %94 : vector<1x32xf32>
      %96 = vector.broadcast %95 : vector<1x32xf32> to vector<8x32xf32>
      %97 = arith.mulf %96, %34 : vector<8x32xf32>
      %cst_32 = arith.constant dense<0.000000e+00> : vector<8xf32>
      %98 = vector.multi_reduction <add>, %97, %cst_32 [1] : vector<8x32xf32> to vector<8xf32>
      %99 = vector.shape_cast %98 : vector<8xf32> to vector<8x1xf32>
      %cst_33 = arith.constant -1.000000e+30 : f32
      %100 = vector.broadcast %cst_33 : f32 to vector<8x1xf32>
      %101 = arith.select %40, %99, %100 : vector<8x1xi1>, vector<8x1xf32>
      %cst_34 = arith.constant dense<0xFF800000> : vector<1xf32>
      %102 = vector.multi_reduction <maximumf>, %101, %cst_34 [0] : vector<8x1xf32> to vector<1xf32>
      %103 = vector.shape_cast %102 : vector<1xf32> to vector<1x1xf32>
      %104 = vector.broadcast %103 : vector<1x1xf32> to vector<8x1xf32>
      %105 = arith.subf %101, %104 : vector<8x1xf32>
      %106 = math.exp %105 : vector<8x1xf32>
      %cst_35 = arith.constant dense<0.000000e+00> : vector<1xf32>
      %107 = vector.multi_reduction <add>, %106, %cst_35 [0] : vector<8x1xf32> to vector<1xf32>
      %108 = vector.shape_cast %107 : vector<1xf32> to vector<1x1xf32>
      %109 = vector.broadcast %108 : vector<1x1xf32> to vector<8x1xf32>
      %110 = arith.divf %106, %109 : vector<8x1xf32>
      %111 = vector.broadcast %110 : vector<8x1xf32> to vector<8x32xf32>
      %112 = arith.mulf %111, %34 : vector<8x32xf32>
      %cst_36 = arith.constant dense<0.000000e+00> : vector<32xf32>
      %113 = vector.multi_reduction <add>, %112, %cst_36 [0] : vector<8x32xf32> to vector<32xf32>
      %114 = vector.shape_cast %113 : vector<32xf32> to vector<1x32xf32>
      %115 = arith.mulf %58, %95 : vector<1x32xf32>
      %cst_37 = arith.constant dense<0.000000e+00> : vector<1xf32>
      %116 = vector.multi_reduction <add>, %115, %cst_37 [1] : vector<1x32xf32> to vector<1xf32>
      %117 = vector.shape_cast %116 : vector<1xf32> to vector<1x1xf32>
      %118 = arith.mulf %77, %114 : vector<1x32xf32>
      %cst_38 = arith.constant dense<0.000000e+00> : vector<1xf32>
      %119 = vector.multi_reduction <add>, %118, %cst_38 [1] : vector<1x32xf32> to vector<1xf32>
      %120 = vector.shape_cast %119 : vector<1xf32> to vector<1x1xf32>
      %121 = arith.addf %117, %120 : vector<1x1xf32>
      %122 = arith.mulf %58, %58 : vector<1x32xf32>
      %cst_39 = arith.constant dense<0.000000e+00> : vector<1xf32>
      %123 = vector.multi_reduction <add>, %122, %cst_39 [1] : vector<1x32xf32> to vector<1xf32>
      %124 = vector.shape_cast %123 : vector<1xf32> to vector<1x1xf32>
      %125 = arith.mulf %77, %77 : vector<1x32xf32>
      %cst_40 = arith.constant dense<0.000000e+00> : vector<1xf32>
      %126 = vector.multi_reduction <add>, %125, %cst_40 [1] : vector<1x32xf32> to vector<1xf32>
      %127 = vector.shape_cast %126 : vector<1xf32> to vector<1x1xf32>
      %128 = arith.addf %124, %127 : vector<1x1xf32>
      %129 = math.sqrt %128 : vector<1x1xf32>
      %cst_41 = arith.constant 9.99999996E-13 : f32
      %130 = vector.broadcast %cst_41 : f32 to vector<1x1xf32>
      %131 = arith.maximumf %129, %130 : vector<1x1xf32>
      %132 = arith.mulf %95, %95 : vector<1x32xf32>
      %cst_42 = arith.constant dense<0.000000e+00> : vector<1xf32>
      %133 = vector.multi_reduction <add>, %132, %cst_42 [1] : vector<1x32xf32> to vector<1xf32>
      %134 = vector.shape_cast %133 : vector<1xf32> to vector<1x1xf32>
      %135 = arith.mulf %114, %114 : vector<1x32xf32>
      %cst_43 = arith.constant dense<0.000000e+00> : vector<1xf32>
      %136 = vector.multi_reduction <add>, %135, %cst_43 [1] : vector<1x32xf32> to vector<1xf32>
      %137 = vector.shape_cast %136 : vector<1xf32> to vector<1x1xf32>
      %138 = arith.addf %134, %137 : vector<1x1xf32>
      %139 = math.sqrt %138 : vector<1x1xf32>
      %cst_44 = arith.constant 9.99999996E-13 : f32
      %140 = vector.broadcast %cst_44 : f32 to vector<1x1xf32>
      %141 = arith.maximumf %139, %140 : vector<1x1xf32>
      %142 = arith.mulf %131, %141 : vector<1x1xf32>
      %143 = arith.divf %121, %142 : vector<1x1xf32>
      %c0_45 = arith.constant 0 : index
      %c0_46 = arith.constant 0 : index
      %144 = vector.load %arg7[%c0_45, %c0_46] : memref<2x32xf32, #tpu.memory_space<vmem>>, vector<2x32xf32>
      %145 = vector.extract_strided_slice %144 {offsets = [0, 0], sizes = [1, 32], strides = [1, 1]} : vector<2x32xf32> to vector<1x32xf32>
      %146 = vector.extract_strided_slice %144 {offsets = [1, 0], sizes = [1, 32], strides = [1, 1]} : vector<2x32xf32> to vector<1x32xf32>
      %147 = arith.mulf %145, %145 : vector<1x32xf32>
      %cst_47 = arith.constant dense<0.000000e+00> : vector<1xf32>
      %148 = vector.multi_reduction <add>, %147, %cst_47 [1] : vector<1x32xf32> to vector<1xf32>
      %149 = vector.shape_cast %148 : vector<1xf32> to vector<1x1xf32>
      %150 = math.sqrt %149 : vector<1x1xf32>
      %cst_48 = arith.constant 9.99999996E-13 : f32
      %151 = vector.broadcast %cst_48 : f32 to vector<1x1xf32>
      %152 = arith.maximumf %150, %151 : vector<1x1xf32>
      %153 = arith.mulf %146, %146 : vector<1x32xf32>
      %cst_49 = arith.constant dense<0.000000e+00> : vector<1xf32>
      %154 = vector.multi_reduction <add>, %153, %cst_49 [1] : vector<1x32xf32> to vector<1xf32>
      %155 = vector.shape_cast %154 : vector<1xf32> to vector<1x1xf32>
      %156 = math.sqrt %155 : vector<1x1xf32>
      %cst_50 = arith.constant 9.99999996E-13 : f32
      %157 = vector.broadcast %cst_50 : f32 to vector<1x1xf32>
      %158 = arith.maximumf %156, %157 : vector<1x1xf32>
      %159 = arith.mulf %145, %146 : vector<1x32xf32>
      %cst_51 = arith.constant dense<0.000000e+00> : vector<1xf32>
      %160 = vector.multi_reduction <add>, %159, %cst_51 [1] : vector<1x32xf32> to vector<1xf32>
      %161 = vector.shape_cast %160 : vector<1xf32> to vector<1x1xf32>
      %162 = arith.mulf %152, %158 : vector<1x1xf32>
      %163 = arith.divf %161, %162 : vector<1x1xf32>
      %cst_52 = arith.constant 0.899999976 : f32
      %164 = vector.broadcast %cst_52 : f32 to vector<1x1xf32>
      %165 = arith.mulf %164, %163 : vector<1x1xf32>
      %cst_53 = arith.constant 1.000000e-01 : f32
      %166 = vector.broadcast %cst_53 : f32 to vector<1x1xf32>
      %167 = arith.mulf %166, %143 : vector<1x1xf32>
      %168 = arith.addf %165, %167 : vector<1x1xf32>
      %cst_54 = arith.constant 1.000000e-01 : f32
      %169 = vector.broadcast %cst_54 : f32 to vector<1x1xf32>
      %170 = arith.divf %168, %169 : vector<1x1xf32>
      %171 = arith.negf %170 : vector<1x1xf32>
      %172 = math.exp %171 : vector<1x1xf32>
      %cst_55 = arith.constant 1.000000e+00 : f32
      %173 = vector.broadcast %cst_55 : f32 to vector<1x1xf32>
      %174 = arith.addf %173, %172 : vector<1x1xf32>
      %175 = arith.divf %173, %174 : vector<1x1xf32>
      %176 = tpu.iota {dimensions = array<i32: 1>} : vector<1x128xi32>
      %c0_i32_56 = arith.constant 0 : i32
      %177 = vector.broadcast %c0_i32_56 : i32 to vector<1x128xi32>
      %178 = arith.cmpi eq, %176, %177 : vector<1x128xi32>
      %c1_i32 = arith.constant 1 : i32
      %179 = vector.broadcast %c1_i32 : i32 to vector<1x128xi32>
      %180 = arith.cmpi eq, %176, %179 : vector<1x128xi32>
      %181 = arith.negf %163 : vector<1x1xf32>
      %182 = math.exp %181 : vector<1x1xf32>
      %cst_57 = arith.constant 1.000000e+00 : f32
      %183 = vector.broadcast %cst_57 : f32 to vector<1x1xf32>
      %184 = arith.addf %183, %182 : vector<1x1xf32>
      %185 = arith.divf %183, %184 : vector<1x1xf32>
      %c2_i32 = arith.constant 2 : i32
      %186 = vector.broadcast %c2_i32 : i32 to vector<1x128xi32>
      %187 = arith.cmpi eq, %176, %186 : vector<1x128xi32>
      %188 = arith.negf %143 : vector<1x1xf32>
      %189 = math.exp %188 : vector<1x1xf32>
      %cst_58 = arith.constant 1.000000e+00 : f32
      %190 = vector.broadcast %cst_58 : f32 to vector<1x1xf32>
      %191 = arith.addf %190, %189 : vector<1x1xf32>
      %192 = arith.divf %190, %191 : vector<1x1xf32>
      %cst_59 = arith.constant 0.000000e+00 : f32
      %193 = vector.broadcast %cst_59 : f32 to vector<1x1xf32>
      %194 = vector.shape_cast %192 : vector<1x1xf32> to vector<1x1xf32>
      %195 = vector.broadcast %194 : vector<1x1xf32> to vector<1x128xf32>
      %196 = vector.shape_cast %193 : vector<1x1xf32> to vector<1x1xf32>
      %197 = vector.broadcast %196 : vector<1x1xf32> to vector<1x128xf32>
      %198 = arith.select %187, %195, %197 : vector<1x128xi1>, vector<1x128xf32>
      %199 = vector.shape_cast %185 : vector<1x1xf32> to vector<1x1xf32>
      %200 = vector.broadcast %199 : vector<1x1xf32> to vector<1x128xf32>
      %201 = arith.select %180, %200, %198 : vector<1x128xi1>, vector<1x128xf32>
      %202 = vector.shape_cast %175 : vector<1x1xf32> to vector<1x1xf32>
      %203 = vector.broadcast %202 : vector<1x1xf32> to vector<1x128xf32>
      %204 = arith.select %178, %203, %201 : vector<1x128xi1>, vector<1x128xf32>
      %c0_60 = arith.constant 0 : index
      %c0_61 = arith.constant 0 : index
      %205 = vector.load %arg8[%c0_60, %c0_61] : memref<1x128xf32, #tpu.memory_space<vmem>>, vector<1x128xf32>
      tpu.vector_store %arg8[%c0_60, %c0_61], %204 {strides = array<i32>} : memref<1x128xf32, #tpu.memory_space<vmem>>, vector<1x128xf32>,
    } else {
    }
    return
  }
  func.func @transform_0(%arg0: i32) -> (i32, i32) {
    %c0_i32 = arith.constant 0 : i32
    %c0_i32_0 = arith.constant 0 : i32
    return %arg0, %c0_i32 : i32, i32
  }
  func.func @transform_1(%arg0: i32) -> (i32, i32) {
    %c0_i32 = arith.constant 0 : i32
    %c0_i32_0 = arith.constant 0 : i32
    return %c0_i32, %arg0 : i32, i32
  }
  func.func @transform_2(%arg0: i32) -> (i32, i32) {
    %c0_i32 = arith.constant 0 : i32
    %c0_i32_0 = arith.constant 0 : i32
    %c0_i32_1 = arith.constant 0 : i32
    return %c0_i32, %c0_i32_0 : i32, i32
  }
  func.func @transform_3(%arg0: i32) -> (i32, i32) {
    %c0_i32 = arith.constant 0 : i32
    %c0_i32_0 = arith.constant 0 : i32
    %c0_i32_1 = arith.constant 0 : i32
    return %c0_i32, %c0_i32_0 : i32, i32
  }
  func.func @transform_4(%arg0: i32) -> (i32, i32) {
    %c0_i32 = arith.constant 0 : i32
    %c0_i32_0 = arith.constant 0 : i32
    %c0_i32_1 = arith.constant 0 : i32
    return %c0_i32, %c0_i32_0 : i32, i32
  }
  func.func @transform_5(%arg0: i32) -> (i32, i32) {
    %c0_i32 = arith.constant 0 : i32
    %c0_i32_0 = arith.constant 0 : i32
    %c0_i32_1 = arith.constant 0 : i32
    return %c0_i32, %c0_i32_0 : i32, i32
  }
  func.func @transform_6(%arg0: i32) -> (i32, i32) {
    %c0_i32 = arith.constant 0 : i32
    %c0_i32_0 = arith.constant 0 : i32
    %c0_i32_1 = arith.constant 0 : i32
    return %c0_i32, %c0_i32_0 : i32, i32
  }
  func.func @transform_7(%arg0: i32) -> (i32, i32) {
    %c0_i32 = arith.constant 0 : i32
    %c0_i32_0 = arith.constant 0 : i32
    %c0_i32_1 = arith.constant 0 : i32
    return %c0_i32, %c0_i32_0 : i32, i32
  }
}

</mosaic_0001>

<llo_original>
// kernel: tpu_custom_call.1
$region0: #{tpu_custom_call.1}
  #allocation0 [shape = 'u32[]', space=smem, size = 0x4, offset = 0x4, fixed_abs, tag = 'smem constant byte address 0x4 - core index']
  #allocation1 [shape = 'u32[144,128]{1,0:T(1,128)}', space=vmem, size = 0x12000, scoped, tag = 'internal scratch']
  #allocation2 [shape = 'f32[16,16]{1,0:T(8,128)}', space=vmem, size = 0x2000, scoped, tag = 'scratch operand']
  %s0 = inlined_call_operand.vmem [shape: bf16[128,16], index: 0, kind: input, shape index: {}]
  %s1 = inlined_call_operand.vmem [shape: s32[1,128], index: 1, kind: input, shape index: {}]
  %s2 = inlined_call_operand.vmem [shape: f32[16,1], index: 2, kind: input, shape index: {}]
  %s3 = inlined_call_operand.vmem [shape: bf16[16,32], index: 3, kind: input, shape index: {}]
  %s4 = inlined_call_operand.vmem [shape: f32[4,32], index: 4, kind: input, shape index: {}]
  %s5 = inlined_call_operand.vmem [shape: f32[4,32], index: 5, kind: input, shape index: {}]
  %s6 = inlined_call_operand.vmem [shape: f32[2,32], index: 6, kind: input, shape index: {}]
  %s7 = inlined_call_operand.hbm [shape: f32[1,128], index: 7, kind: output, shape index: {}]
  %s8 = sld [smem:[#allocation0]]
  $region46: #{tpu_custom_call.1} parent=0
    _
  %s10 = ssub.s32 1, %s8
  %s11 = scalar_select 0, %s10, %s8
  $region1: #{tpu_custom_call.1} parent=0
    #allocation3 [shape = 'u8[512]{0}', space=vmem, size = 0x400, scoped, tag = 'output window, operand 0, single buffered']
    #allocation4 [shape = 's32[1]{0}', space=sflag, size = 0x4, scoped, tag = 'scoped memory for tpu_custom_call.1']
    %12 = vsyncpa [#allocation4], 0
    // Predicated region
    $region2: #{tpu_custom_call.1} parent=1 // pred_check
      _
    $region3: #{tpu_custom_call.1} parent=1 // pred_check_branch
      %14 = sbr.rel (0) target = $region5
    $region4: #{tpu_custom_call.1} parent=1 // pred_region
      _
    $region5: #{tpu_custom_call.1} parent=1 // pred_fallthru
      _
    // Predicated region
    $region6: #{tpu_custom_call.1} parent=1 // pred_check
      _
    $region7: #{tpu_custom_call.1} parent=1 // pred_check_branch
      %16 = sbr.rel (0) target = $region9
    $region8: #{tpu_custom_call.1} parent=1 // pred_region
      _
    $region9: #{tpu_custom_call.1} parent=1 // pred_fallthru
      _
    // Predicated region
    $region10: #{tpu_custom_call.1} parent=1 // pred_check
      _
    $region11: #{tpu_custom_call.1} parent=1 // pred_check_branch
      %18 = sbr.rel (0) target = $region13
    $region12: #{tpu_custom_call.1} parent=1 // pred_region
      _
    $region13: #{tpu_custom_call.1} parent=1 // pred_fallthru
      _
    // Predicated region
    $region14: #{tpu_custom_call.1} parent=1 // pred_check
      _
    $region15: #{tpu_custom_call.1} parent=1 // pred_check_branch
      %20 = sbr.rel (0) target = $region17
    $region16: #{tpu_custom_call.1} parent=1 // pred_region
      _
    $region17: #{tpu_custom_call.1} parent=1 // pred_fallthru
      _
    // Predicated region
    $region18: #{tpu_custom_call.1} parent=1 // pred_check
      _
    $region19: #{tpu_custom_call.1} parent=1 // pred_check_branch
      %22 = sbr.rel (0) target = $region21
    $region20: #{tpu_custom_call.1} parent=1 // pred_region
      _
    $region21: #{tpu_custom_call.1} parent=1 // pred_fallthru
      _
    // Predicated region
    $region22: #{tpu_custom_call.1} parent=1 // pred_check
      _
    $region23: #{tpu_custom_call.1} parent=1 // pred_check_branch
      %24 = sbr.rel (0) target = $region25
    $region24: #{tpu_custom_call.1} parent=1 // pred_region
      _
    $region25: #{tpu_custom_call.1} parent=1 // pred_fallthru
      _
    // Predicated region
    $region26: #{tpu_custom_call.1} parent=1 // pred_check
      _
    $region27: #{tpu_custom_call.1} parent=1 // pred_check_branch
      %26 = sbr.rel (0) target = $region29
    $region28: #{tpu_custom_call.1} parent=1 // pred_region
      _
    $region29: #{tpu_custom_call.1} parent=1 // pred_fallthru
      _
    %p28 = scmp.eq.s32.totalorder 0, 0
    // Predicated region
    $region30: #{tpu_custom_call.1} parent=1 // pred_check
      %p29 = pneg %p28
    $region31: #{tpu_custom_call.1} parent=1 // pred_check_branch
      %31 = sbr.rel (%p29) target = $region33
    $region32: #{tpu_custom_call.1} parent=1 // pred_region
      %vm32 = vcmask 130048
      %33 = vst.msk [vmem:[#allocation2] sm:$0xff] %vm32, 0.0
      %34 = vst.msk [vmem:[#allocation2 + $0x8] sm:$0xff] %vm32, 0.0
    $region33: #{tpu_custom_call.1} parent=1 // pred_fallthru
      _
    %v35 = vlaneseq
    %v36 = vshrl.u32 %v35, 7
    %v37 = vadd.s32 %v36, 8
    %v38 = vld [vmem:[%s1] sm:$0x1]
    %v39 = vlaneseq
    %v40 = vshrl.u32 %v39, 7
    %v41 = vsub.s32 0, %v40
    %v42 = vrot.slane %v38, %v41
    %vm43 = vcmp.eq.s32.totalorder %v36, %v42
    %vm44 = vcmp.eq.s32.totalorder %v37, %v42
    %v45 = vsel %vm43, 1, 0
    %v46 = vsel %vm44, 1, 0
    %v47 = vcvt.s32.f32 %v45
    %v48 = vcvt.s32.f32 %v46
    %v49 = vpack.c.bf16 %v48, %v47
    %v50 = vld [vmem:[#allocation2] sm:$0xff]
    %v51 = vld [vmem:[#allocation2 + $0x8] sm:$0xff]
    %v52 = vld [vmem:[%s0] sm:$0xf]
    %v53 = vld [vmem:[%s0 + $0x4] sm:$0xf]
    %v54 = vld [vmem:[%s0 + $0x8] sm:$0xf]
    %v55 = vld [vmem:[%s0 + $0xc] sm:$0xf]
    %v56 = vld [vmem:[%s0 + $0x10] sm:$0xf]
    %v57 = vld [vmem:[%s0 + $0x14] sm:$0xf]
    %v58 = vld [vmem:[%s0 + $0x18] sm:$0xf]
    %v59 = vld [vmem:[%s0 + $0x1c] sm:$0xf]
    %v60 = vld [vmem:[%s0 + $0x20] sm:$0xf]
    %v61 = vld [vmem:[%s0 + $0x24] sm:$0xf]
    %v62 = vld [vmem:[%s0 + $0x28] sm:$0xf]
    %v63 = vld [vmem:[%s0 + $0x2c] sm:$0xf]
    %v64 = vld [vmem:[%s0 + $0x30] sm:$0xf]
    %v65 = vld [vmem:[%s0 + $0x34] sm:$0xf]
    %v66 = vld [vmem:[%s0 + $0x38] sm:$0xf]
    %v67 = vld [vmem:[%s0 + $0x3c] sm:$0xf]
    %v84 = vunpack.c.l.b16 %v52
    %v85 = vunpack.c.l.b16 %v53
    %v86 = vunpack.c.l.b16 %v54
    %v87 = vunpack.c.l.b16 %v55
    %v88 = vunpack.c.l.b16 %v56
    %v89 = vunpack.c.l.b16 %v57
    %v90 = vunpack.c.l.b16 %v58
    %v91 = vunpack.c.l.b16 %v59
    %v92 = vunpack.c.l.b16 %v60
    %v93 = vunpack.c.l.b16 %v61
    %v94 = vunpack.c.l.b16 %v62
    %v95 = vunpack.c.l.b16 %v63
    %v96 = vunpack.c.l.b16 %v64
    %v97 = vunpack.c.l.b16 %v65
    %v98 = vunpack.c.l.b16 %v66
    %v99 = vunpack.c.l.b16 %v67
    %v100 = vpack.c.b16 %v85, %v84
    %v101 = vpack.c.b16 %v87, %v86
    %v102 = vpack.c.b16 %v89, %v88
    %v103 = vpack.c.b16 %v91, %v90
    %v104 = vpack.c.b16 %v93, %v92
    %v105 = vpack.c.b16 %v95, %v94
    %v106 = vpack.c.b16 %v97, %v96
    %v107 = vpack.c.b16 %v99, %v98
    %116 = vmatprep.subr.bf16.mxu0 0
    %117 = vmatpush1.bf16.msra.mxu0 %v107
    %118 = vmatprep.subr.bf16.mxu0 0
    %119 = vmatpush1.bf16.msra.mxu0 %v106
    %120 = vmatprep.subr.bf16.mxu0 0
    %121 = vmatpush1.bf16.msra.mxu0 %v105
    %122 = vmatprep.subr.bf16.mxu0 0
    %123 = vmatpush1.bf16.msra.mxu0 %v104
    %124 = vmatprep.subr.bf16.mxu0 0
    %125 = vmatpush1.bf16.msra.mxu0 %v103
    %126 = vmatprep.subr.bf16.mxu0 0
    %127 = vmatpush1.bf16.msra.mxu0 %v102
    %128 = vmatprep.subr.bf16.mxu0 0
    %129 = vmatpush1.bf16.msra.mxu0 %v101
    %130 = vmatprep.subr.bf16.mxu0 0
    %131 = vmatpush1.bf16.msra.mxu0 %v100
    %132 = vmatprep.subr.bf16.mxu0 0
    %133 = vmatpush2.bf16.msra.mxu0 0
    %134 = vmatprep.subr.bf16.mxu0 0
    %135 = vmatpush2.bf16.msra.mxu0 0
    %136 = vmatprep.subr.bf16.mxu0 0
    %137 = vmatpush2.bf16.msra.mxu0 0
    %138 = vmatprep.subr.bf16.mxu0 0
    %139 = vmatpush2.bf16.msra.mxu0 0
    %140 = vmatprep.subr.bf16.mxu0 0
    %141 = vmatpush2.bf16.msra.mxu0 0
    %142 = vmatprep.subr.bf16.mxu0 0
    %143 = vmatpush2.bf16.msra.mxu0 0
    %144 = vmatprep.subr.bf16.mxu0 0
    %145 = vmatpush2.bf16.msra.mxu0 0
    %146 = vmatprep.subr.bf16.mxu0 0
    %147 = vmatpush2.bf16.msra.mxu0 0
    %148 = vmatprep.mubr.bf16.mxu0 0
    %149 = vmatmul.mubr.bf16.gmra.mxu0 %v49
    %v150 = vpop.f32.mrf.mxu0
    %v151 = vadd.f32 0.0, %v150
    %v152 = vpop.f32.mrf.mxu0
    %v153 = vpop.f32.mrf.mxu0
    %v154 = vadd.f32 0.0, %v153
    %v155 = vpop.f32.mrf.mxu0
    %156 = vdwg.mxu0
    %v157 = vadd.f32 %v50, %v151
    %v158 = vadd.f32 %v51, %v154
    %vm159 = vcmask 130048
    %160 = vst.msk [vmem:[#allocation2] sm:$0xff] %vm159, %v157
    %161 = vst.msk [vmem:[#allocation2 + $0x8] sm:$0xff] %vm159, %v158
    // Predicated region
    $region34: #{tpu_custom_call.1} parent=1 // pred_check
      %p162 = pneg %p28
    $region35: #{tpu_custom_call.1} parent=1 // pred_check_branch
      %164 = sbr.rel (%p162) target = $region37
    $region36: #{tpu_custom_call.1} parent=1 // pred_region
      %v165 = vld [vmem:[#allocation2] sm:$0xff]
      %v166 = vld [vmem:[#allocation2 + $0x8] sm:$0xff]
      %v167 = vld [vmem:[%s2] sm:$0xff]
      %v168 = vld [vmem:[%s2 + $0x8] sm:$0xff]
      %170 = vset.pattern.permute.xlu0 0
      %171 = vperm.xlu0 %170, %v167
      %v172 = vpop.permute.xlu0 %171
      %175 = vset.pattern.permute.xlu0 0
      %176 = vperm.xlu0 %175, %v168
      %v177 = vpop.permute.xlu0 %176
      %v179 = vmul.f32 %v165, %v172
      %v180 = vmul.f32 %v166, %v177
      %v181 = vpack.c.bf16 %v180, %v179
      %v182 = vld [vmem:[%s3] sm:$0xf]
      %v183 = vld [vmem:[%s3 + $0x4] sm:$0xf]
      %v186 = vunpack.c.l.b16 %v182
      %v187 = vunpack.c.l.b16 %v183
      %v188 = vpack.c.b16 %v187, %v186
      %v191 = vsel %vm159, %v181, 0
      %193 = vmatprep.subr.bf16.mxu0 0
      %194 = vmatpush1.bf16.msra.mxu0 0
      %195 = vmatprep.subr.bf16.mxu0 0
      %196 = vmatpush1.bf16.msra.mxu0 0
      %197 = vmatprep.subr.bf16.mxu0 0
      %198 = vmatpush1.bf16.msra.mxu0 0
      %199 = vmatprep.subr.bf16.mxu0 0
      %200 = vmatpush1.bf16.msra.mxu0 0
      %201 = vmatprep.subr.bf16.mxu0 0
      %202 = vmatpush1.bf16.msra.mxu0 0
      %203 = vmatprep.subr.bf16.mxu0 0
      %204 = vmatpush1.bf16.msra.mxu0 0
      %205 = vmatprep.subr.bf16.mxu0 0
      %206 = vmatpush1.bf16.msra.mxu0 0
      %207 = vmatprep.subr.bf16.mxu0 0
      %208 = vmatpush1.bf16.msra.mxu0 %v188
      %209 = vmatprep.subr.bf16.mxu0 0
      %210 = vmatpush2.bf16.msra.mxu0 0
      %211 = vmatprep.subr.bf16.mxu0 0
      %212 = vmatpush2.bf16.msra.mxu0 0
      %213 = vmatprep.subr.bf16.mxu0 0
      %214 = vmatpush2.bf16.msra.mxu0 0
      %215 = vmatprep.subr.bf16.mxu0 0
      %216 = vmatpush2.bf16.msra.mxu0 0
      %217 = vmatprep.subr.bf16.mxu0 0
      %218 = vmatpush2.bf16.msra.mxu0 0
      %219 = vmatprep.subr.bf16.mxu0 0
      %220 = vmatpush2.bf16.msra.mxu0 0
      %221 = vmatprep.subr.bf16.mxu0 0
      %222 = vmatpush2.bf16.msra.mxu0 0
      %223 = vmatprep.subr.bf16.mxu0 0
      %224 = vmatpush2.bf16.msra.mxu0 0
      %225 = vmatprep.mubr.bf16.mxu0 0
      %226 = vmatmul.mubr.bf16.gmra.mxu0 %v191
      %v227 = vpop.f32.mrf.mxu0
      %v228 = vadd.f32 0.0, %v227
      %v229 = vpop.f32.mrf.mxu0
      %v230 = vpop.f32.mrf.mxu0
      %v231 = vadd.f32 0.0, %v230
      %v232 = vpop.f32.mrf.mxu0
      %233 = vdwg.mxu0
      %v234 = vmul.f32 %v228, %v228
      %v235 = vmul.f32 %v231, %v231
      %vm236 = vcmask 261120
      %v237 = vsel %vm236, %v234, 0.0
      %238 = vadd.xlane.f32.xlu0 %v237
      %v239 = vpop.xlane.xlu0 %238
      %v240 = vsel %vm236, %v235, 0.0
      %241 = vadd.xlane.f32.xlu0 %v240
      %v242 = vpop.xlane.xlu0 %241
      %v243 = vrsqrt.pop %v239
      %v244 = vmul.f32 %v239, %v243
      %vm245 = vcmp.eq.f32.partialorder %v239, inf
      %v246 = vsel %vm245, %v239, %v244
      %vm247 = vcmp.eq.f32.partialorder %v239, 0.0
      %v248 = vand.u32 %v239, 2147483648
      %v249 = vsel %vm247, %v248, %v246
      %v250 = vrsqrt.pop %v242
      %v251 = vmul.f32 %v242, %v250
      %vm252 = vcmp.eq.f32.partialorder %v242, inf
      %v253 = vsel %vm252, %v242, %v251
      %vm254 = vcmp.eq.f32.partialorder %v242, 0.0
      %v255 = vand.u32 %v242, 2147483648
      %v256 = vsel %vm254, %v255, %v253
      %v257 = vmax.f32 %v249, 1e-12
      %v258 = vmax.f32 %v256, 1e-12
      %v259 = vrcp.pop %v257
      %v260 = vmul.f32 %v228, %v259
      %v261 = vrcp.pop %v258
      %v262 = vmul.f32 %v231, %v261
      %vm263 = vcmp.lt.s32.totalorder %v36, 3
      %vm264 = vcmp.lt.s32.totalorder %v36, 4
      %v265 = vld [vmem:[%s4] sm:$0xf]
      %v266 = vxor.u32 %v265, 2147483648
      %v267 = vmul.f32 %v266, 1.442695
      %v268 = vpow.pop %v267
      %v269 = vadd.f32 %v268, 1.0
      %v270 = vrcp.pop %v269
      %v271 = vmul.f32 1.0, %v270
      %v272 = vtanh.pop %v265
      %v274 = vrot.slane %v272, 2
      %v276 = vmul.f32 %v271, %v274
      %v277 = vtanh.pop %v276
      %v279 = vrot.slane %v277, 5
      %v281 = vmul.f32 %v271, %v279
      %v282 = vlaneseq
      %v283 = vshrl.u32 %v282, 7
      %v284 = vsub.s32 3, %v283
      %v285 = vrot.slane %v281, %v284
      %v286 = vmul.f32 %v285, %v260
      %v287 = vsel %vm236, %v286, 0.0
      %288 = vadd.xlane.f32.xlu0 %v287
      %v289 = vpop.xlane.xlu0 %288
      %v290 = vsel %vm263, %v289, -1e+30
      %v291 = vrot.slane %v290, 4
      %v292 = vmax.f32 %v290, %v291
      %v293 = vrot.slane %v292, 2
      %v294 = vmax.f32 %v292, %v293
      %v295 = vrot.slane %v294, 1
      %v296 = vmax.f32 %v294, %v295
      %v297 = vsub.f32 %v290, %v296
      %v298 = vmul.f32 %v297, 1.442695
      %v299 = vpow.pop %v298
      %v300 = vrot.slane %v299, 4
      %v301 = vadd.f32 %v299, %v300
      %v302 = vrot.slane %v301, 2
      %v303 = vadd.f32 %v301, %v302
      %v304 = vrot.slane %v303, 1
      %v305 = vadd.f32 %v303, %v304
      %v306 = vrcp.pop %v305
      %v307 = vmul.f32 %v299, %v306
      %v308 = vmul.f32 %v307, %v260
      %v309 = vsel %vm236, %v308, 0.0
      %v310 = vrot.slane %v309, 4
      %v311 = vadd.f32 %v309, %v310
      %v312 = vrot.slane %v311, 2
      %v313 = vadd.f32 %v311, %v312
      %v314 = vrot.slane %v313, 1
      %v315 = vadd.f32 %v313, %v314
      %v316 = vld [vmem:[%s5] sm:$0xf]
      %v317 = vxor.u32 %v316, 2147483648
      %v318 = vmul.f32 %v317, 1.442695
      %v319 = vpow.pop %v318
      %v320 = vadd.f32 %v319, 1.0
      %v321 = vrcp.pop %v320
      %v322 = vmul.f32 1.0, %v321
      %v323 = vtanh.pop %v316
      %v325 = vrot.slane %v323, 2
      %v327 = vmul.f32 %v322, %v325
      %v328 = vtanh.pop %v327
      %v330 = vrot.slane %v328, 5
      %v332 = vmul.f32 %v322, %v330
      %v333 = vlaneseq
      %v334 = vshrl.u32 %v333, 7
      %v335 = vsub.s32 3, %v334
      %v336 = vrot.slane %v332, %v335
      %v337 = vmul.f32 %v336, %v262
      %v338 = vsel %vm236, %v337, 0.0
      %339 = vadd.xlane.f32.xlu0 %v338
      %v340 = vpop.xlane.xlu0 %339
      %v341 = vsel %vm264, %v340, -1e+30
      %v342 = vrot.slane %v341, 4
      %v343 = vmax.f32 %v341, %v342
      %v344 = vrot.slane %v343, 2
      %v345 = vmax.f32 %v343, %v344
      %v346 = vrot.slane %v345, 1
      %v347 = vmax.f32 %v345, %v346
      %v348 = vsub.f32 %v341, %v347
      %v349 = vmul.f32 %v348, 1.442695
      %v350 = vpow.pop %v349
      %v351 = vrot.slane %v350, 4
      %v352 = vadd.f32 %v350, %v351
      %v353 = vrot.slane %v352, 2
      %v354 = vadd.f32 %v352, %v353
      %v355 = vrot.slane %v354, 1
      %v356 = vadd.f32 %v354, %v355
      %v357 = vrcp.pop %v356
      %v358 = vmul.f32 %v350, %v357
      %v359 = vmul.f32 %v358, %v262
      %v360 = vsel %vm236, %v359, 0.0
      %v361 = vrot.slane %v360, 4
      %v362 = vadd.f32 %v360, %v361
      %v363 = vrot.slane %v362, 2
      %v364 = vadd.f32 %v362, %v363
      %v365 = vrot.slane %v364, 1
      %v366 = vadd.f32 %v364, %v365
      %v367 = vmul.f32 %v281, %v332
      %vm368 = vcmask 257027
      %v369 = vsel %vm368, %v367, 0.0
      %370 = vadd.xlane.f32.xlu0 %v369
      %v371 = vpop.xlane.xlu0 %370
      %v372 = vmul.f32 %v315, %v366
      %v373 = vsel %vm236, %v372, 0.0
      %374 = vadd.xlane.f32.xlu0 %v373
      %v375 = vpop.xlane.xlu0 %374
      %v376 = vadd.f32 %v371, %v375
      %v377 = vmul.f32 %v281, %v281
      %v378 = vsel %vm368, %v377, 0.0
      %379 = vadd.xlane.f32.xlu0 %v378
      %v380 = vpop.xlane.xlu0 %379
      %v381 = vmul.f32 %v315, %v315
      %v382 = vsel %vm236, %v381, 0.0
      %383 = vadd.xlane.f32.xlu0 %v382
      %v384 = vpop.xlane.xlu0 %383
      %v385 = vadd.f32 %v380, %v384
      %v386 = vrsqrt.pop %v385
      %v387 = vmul.f32 %v385, %v386
      %vm388 = vcmp.eq.f32.partialorder %v385, inf
      %v389 = vsel %vm388, %v385, %v387
      %vm390 = vcmp.eq.f32.partialorder %v385, 0.0
      %v391 = vand.u32 %v385, 2147483648
      %v392 = vsel %vm390, %v391, %v389
      %v393 = vmax.f32 %v392, 1e-12
      %v394 = vmul.f32 %v332, %v332
      %v395 = vsel %vm368, %v394, 0.0
      %396 = vadd.xlane.f32.xlu0 %v395
      %v397 = vpop.xlane.xlu0 %396
      %v398 = vmul.f32 %v366, %v366
      %v399 = vsel %vm236, %v398, 0.0
      %400 = vadd.xlane.f32.xlu0 %v399
      %v401 = vpop.xlane.xlu0 %400
      %v402 = vadd.f32 %v397, %v401
      %v403 = vrsqrt.pop %v402
      %v404 = vmul.f32 %v402, %v403
      %vm405 = vcmp.eq.f32.partialorder %v402, inf
      %v406 = vsel %vm405, %v402, %v404
      %vm407 = vcmp.eq.f32.partialorder %v402, 0.0
      %v408 = vand.u32 %v402, 2147483648
      %v409 = vsel %vm407, %v408, %v406
      %v410 = vmax.f32 %v409, 1e-12
      %v411 = vmul.f32 %v393, %v410
      %v412 = vrcp.pop %v411
      %v413 = vmul.f32 %v376, %v412
      %v414 = vld [vmem:[%s6] sm:$0x3]
      %v415 = vmul.f32 %v414, %v414
      %vm416 = vcmask 253952
      %v417 = vsel %vm416, %v415, 0.0
      %418 = vadd.xlane.f32.xlu0 %v417
      %v419 = vpop.xlane.xlu0 %418
      %v420 = vrsqrt.pop %v419
      %v421 = vmul.f32 %v419, %v420
      %vm422 = vcmp.eq.f32.partialorder %v419, inf
      %v423 = vsel %vm422, %v419, %v421
      %vm424 = vcmp.eq.f32.partialorder %v419, 0.0
      %v425 = vand.u32 %v419, 2147483648
      %v426 = vsel %vm424, %v425, %v423
      %v427 = vmax.f32 %v426, 1e-12
      %vm428 = vcmask 254977
      %v429 = vsel %vm428, %v415, 0.0
      %430 = vadd.xlane.f32.xlu0 %v429
      %v431 = vpop.xlane.xlu0 %430
      %v432 = vrsqrt.pop %v431
      %v433 = vmul.f32 %v431, %v432
      %vm434 = vcmp.eq.f32.partialorder %v431, inf
      %v435 = vsel %vm434, %v431, %v433
      %vm436 = vcmp.eq.f32.partialorder %v431, 0.0
      %v437 = vand.u32 %v431, 2147483648
      %v438 = vsel %vm436, %v437, %v435
      %v439 = vmax.f32 %v438, 1e-12
      %v441 = vrot.slane %v414, 1
      %v443 = vmul.f32 %v414, %v441
      %v444 = vsel %vm416, %v443, 0.0
      %445 = vadd.xlane.f32.xlu0 %v444
      %v446 = vpop.xlane.xlu0 %445
      %v448 = vrot.slane %v439, 1
      %v450 = vmul.f32 %v427, %v448
      %v451 = vrcp.pop %v450
      %v452 = vmul.f32 %v446, %v451
      %v453 = vmul.f32 %v452, 0.9
      %v454 = vmul.f32 %v413, 0.1
      %v456 = vrot.slane %v454, 3
      %v458 = vadd.f32 %v453, %v456
      %v459 = vrcp.pop 0.1
      %v460 = vmul.f32 %v458, %v459
      %v461 = vxor.u32 %v460, 2147483648
      %v462 = vmul.f32 %v461, 1.442695
      %v463 = vpow.pop %v462
      %v464 = vadd.f32 %v463, 1.0
      %v465 = vrcp.pop %v464
      %v466 = vmul.f32 1.0, %v465
      %v467 = vlaneseq
      %v468 = vand.u32 %v467, 127
      %vm469 = vcmp.eq.s32.totalorder %v468, 0
      %vm470 = vcmp.eq.s32.totalorder %v468, 1
      %v471 = vxor.u32 %v452, 2147483648
      %v472 = vmul.f32 %v471, 1.442695
      %v473 = vpow.pop %v472
      %v474 = vadd.f32 %v473, 1.0
      %v475 = vrcp.pop %v474
      %v476 = vmul.f32 1.0, %v475
      %vm477 = vcmp.eq.s32.totalorder %v468, 2
      %v478 = vxor.u32 %v413, 2147483648
      %v479 = vmul.f32 %v478, 1.442695
      %v480 = vpow.pop %v479
      %v481 = vadd.f32 %v480, 1.0
      %v482 = vrcp.pop %v481
      %v483 = vmul.f32 1.0, %v482
      %v484 = vsel %vm477, %v483, 0.0
      %486 = vset.pattern.permute.xlu0 0
      %487 = vperm.xlu0 %486, %v476
      %v488 = vpop.permute.xlu0 %487
      %v491 = vrot.slane %v484, 3
      %v493 = vsel %vm470, %v488, %v491
      %495 = vset.pattern.permute.xlu0 0
      %496 = vperm.xlu0 %495, %v466
      %v497 = vpop.permute.xlu0 %496
      %v499 = vsel %vm469, %v497, %v493
      %500 = vst [vmem:[#allocation3] sm:$0x1] %v499
    $region37: #{tpu_custom_call.1} parent=1 // pred_fallthru
      _
    // Predicated region
    $region38: #{tpu_custom_call.1} parent=1 // pred_check
      _
    $region39: #{tpu_custom_call.1} parent=1 // pred_check_branch
      %502 = sbr.rel (0) target = $region41
    $region40: #{tpu_custom_call.1} parent=1 // pred_region
      %s504 = ssub.s32 16, 16
      %505 = vsyncadd [#allocation4], %s504
      %s507 = sshll.u32 [#allocation3], 4
      %s508 = int_to_ptr.vmem [resolvable:$true] %s507
      %510 = dma.vmem_to_hbm [thread:$0]  %s508, 16, %s7, [#allocation4]
    $region41: #{tpu_custom_call.1} parent=1 // pred_fallthru
      _
    // Predicated region
    $region42: #{tpu_custom_call.1} parent=1 // pred_check
      _
    $region43: #{tpu_custom_call.1} parent=1 // pred_check_branch
      %512 = sbr.rel (0) target = $region45
    $region44: #{tpu_custom_call.1} parent=1 // pred_region
      %513 = dma.done [#allocation4], 16
    $region45: #{tpu_custom_call.1} parent=1 // pred_fallthru
      _
    %514 = vsyncpa [#allocation4], 1

</llo_original>
